<compile_context>
chip_gen: v7x
topology: tpu7x:2x2x1
jax: 0.10.0
libtpu: 0.0.40
codegen_flags: <defaults>
</compile_context>

<pallas_src>
import math
import numpy as np
import jax
import jax.numpy as jnp
from jax.experimental import pallas as pl
from jax.experimental.pallas import tpu as pltpu

# ---- model hyper-parameters (match the nn.Module defaults) -----------------
IN_DIM = 16
D_MODEL = 64
NHEAD = 4
HEAD_DIM = D_MODEL // NHEAD
NUM_LAYERS = 2
DIM_FF = 128
OUT_DIM = 2
LN_EPS = 1e-5

BATCH = 16
PAD_OUT = 128          # lane-dense output width (>= OUT_DIM, multiple of 128)
W_LANES = 128          # lane width of the packed parameter slabs

# ---- weight-slab row layout (static; 64-wide matrices lane-paired) ---------
EW_R = 0                                   # (IN_DIM, 64) in cols 0:64
WVO_R = EW_R + IN_DIM                      # 16:  (64,128) = [Wvo_l0 | Wvo_l1]
W1_R0 = WVO_R + D_MODEL                    # 80:  layer l at rows 80 + l*64, full 128 cols
W2_R = W1_R0 + NUM_LAYERS * D_MODEL        # 208: (128,128) = [W2_l0 | W2_l1]
FCW_R = W2_R + DIM_FF                      # 336: (64,128), cols >= OUT_DIM are zero
W_ROWS = FCW_R + D_MODEL                   # 400 rows  ->  200 KiB f32

# ---- vector-slab row layout (one row per vector, 128 lanes) -----------------
EB_R = 0
LAYER_V_R0 = 1
VOB_OFF, B1_OFF, B2_OFF, G1_OFF, BE1_OFF, G2_OFF, BE2_OFF = range(7)
LAYER_V_STRIDE = 7
FCB_R = LAYER_V_R0 + NUM_LAYERS * LAYER_V_STRIDE   # 15
V_ROWS = 16                                        # 8 KiB f32


def _layernorm(x, gamma, beta):
    # PyTorch LayerNorm: biased variance over last dim, eps inside rsqrt.
    mu = jnp.mean(x, axis=-1, keepdims=True)
    var = jnp.mean((x - mu) ** 2, axis=-1, keepdims=True)
    return (x - mu) * jax.lax.rsqrt(var + LN_EPS) * gamma + beta


def transformer_kernel(x_ref, w_ref, v_ref, out_ref):
    def vrow(r, width):
        # (1, width) row view of the vector slab; offset-0 lane slice only.
        return v_ref[pl.ds(r, 1), :][:, :width]

    x = x_ref[...]  # (BATCH, IN_DIM) float32

    # ---- embedding: x @ We + be ----
    ew = w_ref[pl.ds(EW_R, IN_DIM), :][:, :D_MODEL]
    h = jnp.dot(x, ew, preferred_element_type=jnp.float32) + vrow(EB_R, D_MODEL)

    # lane-paired matrices loaded once, reused by both (statically unrolled) layers
    wvo_pair = w_ref[pl.ds(WVO_R, D_MODEL), :]   # (64, 128) = [Wvo_l0 | Wvo_l1]
    w2_pair = w_ref[pl.ds(W2_R, DIM_FF), :]      # (128,128) = [W2_l0  | W2_l1 ]

    for l in range(NUM_LAYERS):
        c0 = l * D_MODEL
        vr = LAYER_V_R0 + l * LAYER_V_STRIDE

        # ---- multi-head self-attention, seq_len == 1, folded V/out_proj ----
        # attn = out_proj(h @ Wv + bv) = h @ (Wv @ Wo) + (bv @ Wo + ob)
        attn = jnp.dot(h, wvo_pair[:, c0:c0 + D_MODEL],
                       preferred_element_type=jnp.float32) + vrow(vr + VOB_OFF, D_MODEL)

        # post-norm residual 1 (dropout1 is identity in eval mode)
        h = _layernorm(h + attn, vrow(vr + G1_OFF, D_MODEL), vrow(vr + BE1_OFF, D_MODEL))

        # ---- feed-forward: linear2(relu(linear1(h))) ----
        w1 = w_ref[pl.ds(W1_R0 + l * D_MODEL, D_MODEL), :]   # (64, 128)
        ff = jnp.dot(h, w1, preferred_element_type=jnp.float32) + vrow(vr + B1_OFF, DIM_FF)
        ff = jnp.maximum(ff, 0.0)
        ff = jnp.dot(ff, w2_pair[:, c0:c0 + D_MODEL],
                     preferred_element_type=jnp.float32) + vrow(vr + B2_OFF, D_MODEL)

        # post-norm residual 2 (dropout2 is identity in eval mode)
        h = _layernorm(h + ff, vrow(vr + G2_OFF, D_MODEL), vrow(vr + BE2_OFF, D_MODEL))

    # ---- final classifier head: lane-dense (B, 128) store, fc zero-padded ----
    fcw = w_ref[pl.ds(FCW_R, D_MODEL), :]          # (64, 128)
    out_ref[...] = jnp.dot(h, fcw, preferred_element_type=jnp.float32) + vrow(FCB_R, PAD_OUT)


# ---------------- parameter packing (done ONCE, outside the hot path) -------
def pack_params(p):
    D = D_MODEL

    def lane_pad(a, width=W_LANES):
        return jnp.pad(a, ((0, 0), (0, width - a.shape[1])))

    # fold V projection and out_proj per layer
    wvo, bvo = [], []
    for l in range(NUM_LAYERS):
        wv = p["ipw"][l][:, 2 * D:3 * D]
        bv = p["ipb"][l][:, 2 * D:3 * D]
        wvo.append(wv @ p["ow"][l])
        bvo.append(bv @ p["ow"][l] + p["ob"][l])

    # weight slab: (W_ROWS, 128), lane-paired 64-wide matrices
    w_rows = [lane_pad(p["ew"])]                                       # 16 rows
    w_rows.append(jnp.concatenate([wvo[0], wvo[1]], axis=1))           # 64 rows
    w_rows.append(p["w1"][0])                                          # 64 rows
    w_rows.append(p["w1"][1])                                          # 64 rows
    w_rows.append(jnp.concatenate([p["w2"][0], p["w2"][1]], axis=1))   # 128 rows
    fcw_pad = jnp.zeros((D, W_LANES), jnp.float32).at[:, :OUT_DIM].set(p["fcw"])
    w_rows.append(fcw_pad)                                             # 64 rows
    w_slab = jnp.concatenate(w_rows, axis=0)

    # vector slab: (V_ROWS, 128)
    v_rows = [lane_pad(p["eb"])]
    for l in range(NUM_LAYERS):
        v_rows += [lane_pad(bvo[l]), p["b1"][l], lane_pad(p["b2"][l]),
                   lane_pad(p["g1"][l]), lane_pad(p["be1"][l]),
                   lane_pad(p["g2"][l]), lane_pad(p["be2"][l])]
    fcb_pad = jnp.zeros((1, W_LANES), jnp.float32).at[:, :OUT_DIM].set(p["fcb"])
    v_rows.append(fcb_pad)
    v_slab = jnp.concatenate(v_rows, axis=0)

    assert w_slab.shape == (W_ROWS, W_LANES), w_slab.shape
    assert v_slab.shape == (V_ROWS, W_LANES), v_slab.shape
    return w_slab, v_slab


# ---------------- forward wrapper (jit'ed; slabs passed in pre-packed) ------
def _transformer_call(batch):
    # No grid: single invocation, whole arrays resident in VMEM (total < 1 MiB),
    # no dead double-buffer / pipeline bookkeeping for the one-shot weight DMA.
    return pl.pallas_call(
        transformer_kernel,
        out_shape=jax.ShapeDtypeStruct((batch, PAD_OUT), jnp.float32),
        in_specs=[pl.BlockSpec(memory_space=pltpu.MemorySpace.VMEM)] * 3,
        out_specs=pl.BlockSpec(memory_space=pltpu.MemorySpace.VMEM),
    )


@jax.jit
def simple_transformer_forward(x, w_slab, v_slab):
    # TODO(synk): if callers ever batch >> 16 rows, add a batch grid with
    # constant index_map for the two slabs and mark it "parallel" (v7x 2nd TC).
    out_padded = _transformer_call(x.shape[0])(x, w_slab, v_slab)
    return out_padded[:, :OUT_DIM]


# ---------------- deterministic parameter init ------------------------------
def init_params(key):
    def nrm(key, shape, scale=0.05):
        return scale * jax.random.normal(key, shape, dtype=jnp.float32)

    ks = jax.random.split(key, 16)
    L = NUM_LAYERS
    params = {
        "ew": nrm(ks[0], (IN_DIM, D_MODEL)),
        "eb": nrm(ks[1], (1, D_MODEL)),
        "ipw": nrm(ks[2], (L, D_MODEL, 3 * D_MODEL)),
        "ipb": nrm(ks[3], (L, 1, 3 * D_MODEL)),
        "ow": nrm(ks[4], (L, D_MODEL, D_MODEL)),
        "ob": nrm(ks[5], (L, 1, D_MODEL)),
        "w1": nrm(ks[6], (L, D_MODEL, DIM_FF)),
        "b1": nrm(ks[7], (L, 1, DIM_FF)),
        "w2": nrm(ks[8], (L, DIM_FF, D_MODEL)),
        "b2": nrm(ks[9], (L, 1, D_MODEL)),
        "g1": jnp.ones((L, 1, D_MODEL), jnp.float32),
        "be1": jnp.zeros((L, 1, D_MODEL), jnp.float32),
        "g2": jnp.ones((L, 1, D_MODEL), jnp.float32),
        "be2": jnp.zeros((L, 1, D_MODEL), jnp.float32),
        "fcw": nrm(ks[10], (D_MODEL, OUT_DIM)),
        "fcb": nrm(ks[11], (1, OUT_DIM)),
    }
    return params


# ---------------- pure-JAX reference (full attention path, mirrors PyTorch) --
def reference_forward(x, p):
    h = x @ p["ew"] + p["eb"]
    scale = 1.0 / math.sqrt(HEAD_DIM)
    for l in range(NUM_LAYERS):
        qkv = h @ p["ipw"][l] + p["ipb"][l]
        q, k, v = qkv[:, :D_MODEL], qkv[:, D_MODEL:2 * D_MODEL], qkv[:, 2 * D_MODEL:]
        heads = []
        for hh in range(NHEAD):
            lo = hh * HEAD_DIM
            qh, kh, vh = q[:, lo:lo + HEAD_DIM], k[:, lo:lo + HEAD_DIM], v[:, lo:lo + HEAD_DIM]
            s = jnp.sum(qh * kh, axis=-1, keepdims=True) * scale
            p_attn = jax.nn.softmax(s, axis=-1)  # single key -> exactly 1.0
            heads.append(p_attn * vh)
        attn = jnp.concatenate(heads, axis=-1) @ p["ow"][l] + p["ob"][l]
        h = _layernorm(h + attn, p["g1"][l], p["be1"][l])
        ff = jnp.maximum(h @ p["w1"][l] + p["b1"][l], 0.0) @ p["w2"][l] + p["b2"][l]
        h = _layernorm(h + ff, p["g2"][l], p["be2"][l])
    return h @ p["fcw"] + p["fcb"]


if __name__ == "__main__":
    key = jax.random.PRNGKey(0)
    k_x, k_p = jax.random.split(key)
    x = jax.random.normal(k_x, (BATCH, IN_DIM), dtype=jnp.float32)
    params = init_params(k_p)

    # pack the 16 parameter arrays into two lane-dense slabs ONCE
    w_slab, v_slab = pack_params(params)
    w_slab, v_slab = jax.block_until_ready((w_slab, v_slab))

    out = simple_transformer_forward(x, w_slab, v_slab)
    out = jax.block_until_ready(out)

    ref = reference_forward(x, params)
    # Wv@Wo folding changes rounding slightly vs. the reference -> not bit-exact,
    # but well within this tolerance.
    np.testing.assert_allclose(np.asarray(out), np.asarray(ref), rtol=1e-4, atol=1e-5)

    assert out.shape == (BATCH, OUT_DIM)
    print("KERNEL_OK")
</pallas_src>

<mosaic_0001>
module attributes {stable_mosaic.version = 11 : i64} {
  func.func @transformer_kernel(%arg0: memref<16x16xf32, #tpu.memory_space<vmem>>, %arg1: memref<400x128xf32, #tpu.memory_space<vmem>>, %arg2: memref<16x128xf32, #tpu.memory_space<vmem>>, %arg3: memref<16x128xf32, #tpu.memory_space<vmem>>) attributes {dimension_semantics = [], scalar_prefetch = 0 : i64, scratch_operands = 0 : i64, tpu.core_type = #tpu.core_type<tc>} {
    %c0 = arith.constant 0 : index
    %c0_0 = arith.constant 0 : index
    %0 = vector.load %arg0[%c0, %c0_0] : memref<16x16xf32, #tpu.memory_space<vmem>>, vector<16x16xf32>
    %c0_1 = arith.constant 0 : index
    %c0_2 = arith.constant 0 : index
    %1 = vector.load %arg1[%c0_1, %c0_2] : memref<400x128xf32, #tpu.memory_space<vmem>>, vector<16x128xf32>
    %2 = vector.extract_strided_slice %1 {offsets = [0, 0], sizes = [16, 64], strides = [1, 1]} : vector<16x128xf32> to vector<16x64xf32>
    %cst = arith.constant dense<0.000000e+00> : vector<16x64xf32>
    %3 = tpu.matmul %0, %2, %cst {dimension_numbers = #tpu.dot_dimension_numbers<[1], [0], [0], [1], [0, 0, 1, 1], [], []>} : vector<16x16xf32>, vector<16x64xf32>, vector<16x64xf32> -> vector<16x64xf32>
    %c0_3 = arith.constant 0 : index
    %c0_4 = arith.constant 0 : index
    %4 = vector.load %arg2[%c0_3, %c0_4] : memref<16x128xf32, #tpu.memory_space<vmem>>, vector<1x128xf32>
    %5 = vector.extract_strided_slice %4 {offsets = [0, 0], sizes = [1, 64], strides = [1, 1]} : vector<1x128xf32> to vector<1x64xf32>
    %6 = vector.broadcast %5 : vector<1x64xf32> to vector<16x64xf32>
    %7 = arith.addf %3, %6 : vector<16x64xf32>
    %c16 = arith.constant 16 : index
    %c0_5 = arith.constant 0 : index
    %8 = vector.load %arg1[%c16, %c0_5] : memref<400x128xf32, #tpu.memory_space<vmem>>, vector<64x128xf32>
    %c208 = arith.constant 208 : index
    %c0_6 = arith.constant 0 : index
    %9 = vector.load %arg1[%c208, %c0_6] : memref<400x128xf32, #tpu.memory_space<vmem>>, vector<128x128xf32>
    %10 = vector.extract_strided_slice %8 {offsets = [0, 0], sizes = [64, 64], strides = [1, 1]} : vector<64x128xf32> to vector<64x64xf32>
    %cst_7 = arith.constant dense<0.000000e+00> : vector<16x64xf32>
    %11 = tpu.matmul %7, %10, %cst_7 {dimension_numbers = #tpu.dot_dimension_numbers<[1], [0], [0], [1], [0, 0, 1, 1], [], []>} : vector<16x64xf32>, vector<64x64xf32>, vector<16x64xf32> -> vector<16x64xf32>
    %c1 = arith.constant 1 : index
    %c0_8 = arith.constant 0 : index
    %12 = vector.load %arg2[%c1, %c0_8] : memref<16x128xf32, #tpu.memory_space<vmem>>, vector<1x128xf32>
    %13 = vector.extract_strided_slice %12 {offsets = [0, 0], sizes = [1, 64], strides = [1, 1]} : vector<1x128xf32> to vector<1x64xf32>
    %14 = vector.broadcast %13 : vector<1x64xf32> to vector<16x64xf32>
    %15 = arith.addf %11, %14 : vector<16x64xf32>
    %16 = arith.addf %7, %15 : vector<16x64xf32>
    %c4 = arith.constant 4 : index
    %c0_9 = arith.constant 0 : index
    %17 = vector.load %arg2[%c4, %c0_9] : memref<16x128xf32, #tpu.memory_space<vmem>>, vector<1x128xf32>
    %18 = vector.extract_strided_slice %17 {offsets = [0, 0], sizes = [1, 64], strides = [1, 1]} : vector<1x128xf32> to vector<1x64xf32>
    %c5 = arith.constant 5 : index
    %c0_10 = arith.constant 0 : index
    %19 = vector.load %arg2[%c5, %c0_10] : memref<16x128xf32, #tpu.memory_space<vmem>>, vector<1x128xf32>
    %20 = vector.extract_strided_slice %19 {offsets = [0, 0], sizes = [1, 64], strides = [1, 1]} : vector<1x128xf32> to vector<1x64xf32>
    %cst_11 = arith.constant dense<0.000000e+00> : vector<16xf32>
    %21 = vector.multi_reduction <add>, %16, %cst_11 [1] : vector<16x64xf32> to vector<16xf32>
    %22 = vector.shape_cast %21 : vector<16xf32> to vector<16x1xf32>
    %cst_12 = arith.constant 6.400000e+01 : f32
    %23 = vector.broadcast %cst_12 : f32 to vector<16x1xf32>
    %24 = arith.divf %22, %23 : vector<16x1xf32>
    %25 = vector.broadcast %24 : vector<16x1xf32> to vector<16x64xf32>
    %26 = arith.subf %16, %25 : vector<16x64xf32>
    %27 = arith.mulf %26, %26 : vector<16x64xf32>
    %cst_13 = arith.constant dense<0.000000e+00> : vector<16xf32>
    %28 = vector.multi_reduction <add>, %27, %cst_13 [1] : vector<16x64xf32> to vector<16xf32>
    %29 = vector.shape_cast %28 : vector<16xf32> to vector<16x1xf32>
    %cst_14 = arith.constant 6.400000e+01 : f32
    %30 = vector.broadcast %cst_14 : f32 to vector<16x1xf32>
    %31 = arith.divf %29, %30 : vector<16x1xf32>
    %32 = vector.broadcast %24 : vector<16x1xf32> to vector<16x64xf32>
    %33 = arith.subf %16, %32 : vector<16x64xf32>
    %cst_15 = arith.constant 9.99999974E-6 : f32
    %34 = vector.broadcast %cst_15 : f32 to vector<16x1xf32>
    %35 = arith.addf %31, %34 : vector<16x1xf32>
    %36 = math.rsqrt %35 : vector<16x1xf32>
    %37 = vector.broadcast %36 : vector<16x1xf32> to vector<16x64xf32>
    %38 = arith.mulf %33, %37 : vector<16x64xf32>
    %39 = vector.broadcast %18 : vector<1x64xf32> to vector<16x64xf32>
    %40 = arith.mulf %38, %39 : vector<16x64xf32>
    %41 = vector.broadcast %20 : vector<1x64xf32> to vector<16x64xf32>
    %42 = arith.addf %40, %41 : vector<16x64xf32>
    %c80 = arith.constant 80 : index
    %c0_16 = arith.constant 0 : index
    %43 = vector.load %arg1[%c80, %c0_16] : memref<400x128xf32, #tpu.memory_space<vmem>>, vector<64x128xf32>
    %cst_17 = arith.constant dense<0.000000e+00> : vector<16x128xf32>
    %44 = tpu.matmul %42, %43, %cst_17 {dimension_numbers = #tpu.dot_dimension_numbers<[1], [0], [0], [1], [0, 0, 1, 1], [], []>} : vector<16x64xf32>, vector<64x128xf32>, vector<16x128xf32> -> vector<16x128xf32>
    %c2 = arith.constant 2 : index
    %c0_18 = arith.constant 0 : index
    %45 = vector.load %arg2[%c2, %c0_18] : memref<16x128xf32, #tpu.memory_space<vmem>>, vector<1x128xf32>
    %46 = vector.broadcast %45 : vector<1x128xf32> to vector<16x128xf32>
    %47 = arith.addf %44, %46 : vector<16x128xf32>
    %cst_19 = arith.constant 0.000000e+00 : f32
    %48 = vector.broadcast %cst_19 : f32 to vector<16x128xf32>
    %49 = arith.maximumf %47, %48 : vector<16x128xf32>
    %50 = vector.extract_strided_slice %9 {offsets = [0, 0], sizes = [128, 64], strides = [1, 1]} : vector<128x128xf32> to vector<128x64xf32>
    %cst_20 = arith.constant dense<0.000000e+00> : vector<16x64xf32>
    %51 = tpu.matmul %49, %50, %cst_20 {dimension_numbers = #tpu.dot_dimension_numbers<[1], [0], [0], [1], [0, 0, 1, 1], [], []>} : vector<16x128xf32>, vector<128x64xf32>, vector<16x64xf32> -> vector<16x64xf32>
    %c3 = arith.constant 3 : index
    %c0_21 = arith.constant 0 : index
    %52 = vector.load %arg2[%c3, %c0_21] : memref<16x128xf32, #tpu.memory_space<vmem>>, vector<1x128xf32>
    %53 = vector.extract_strided_slice %52 {offsets = [0, 0], sizes = [1, 64], strides = [1, 1]} : vector<1x128xf32> to vector<1x64xf32>
    %54 = vector.broadcast %53 : vector<1x64xf32> to vector<16x64xf32>
    %55 = arith.addf %51, %54 : vector<16x64xf32>
    %56 = arith.addf %42, %55 : vector<16x64xf32>
    %c6 = arith.constant 6 : index
    %c0_22 = arith.constant 0 : index
    %57 = vector.load %arg2[%c6, %c0_22] : memref<16x128xf32, #tpu.memory_space<vmem>>, vector<1x128xf32>
    %58 = vector.extract_strided_slice %57 {offsets = [0, 0], sizes = [1, 64], strides = [1, 1]} : vector<1x128xf32> to vector<1x64xf32>
    %c7 = arith.constant 7 : index
    %c0_23 = arith.constant 0 : index
    %59 = vector.load %arg2[%c7, %c0_23] : memref<16x128xf32, #tpu.memory_space<vmem>>, vector<1x128xf32>
    %60 = vector.extract_strided_slice %59 {offsets = [0, 0], sizes = [1, 64], strides = [1, 1]} : vector<1x128xf32> to vector<1x64xf32>
    %cst_24 = arith.constant dense<0.000000e+00> : vector<16xf32>
    %61 = vector.multi_reduction <add>, %56, %cst_24 [1] : vector<16x64xf32> to vector<16xf32>
    %62 = vector.shape_cast %61 : vector<16xf32> to vector<16x1xf32>
    %cst_25 = arith.constant 6.400000e+01 : f32
    %63 = vector.broadcast %cst_25 : f32 to vector<16x1xf32>
    %64 = arith.divf %62, %63 : vector<16x1xf32>
    %65 = vector.broadcast %64 : vector<16x1xf32> to vector<16x64xf32>
    %66 = arith.subf %56, %65 : vector<16x64xf32>
    %67 = arith.mulf %66, %66 : vector<16x64xf32>
    %cst_26 = arith.constant dense<0.000000e+00> : vector<16xf32>
    %68 = vector.multi_reduction <add>, %67, %cst_26 [1] : vector<16x64xf32> to vector<16xf32>
    %69 = vector.shape_cast %68 : vector<16xf32> to vector<16x1xf32>
    %cst_27 = arith.constant 6.400000e+01 : f32
    %70 = vector.broadcast %cst_27 : f32 to vector<16x1xf32>
    %71 = arith.divf %69, %70 : vector<16x1xf32>
    %72 = vector.broadcast %64 : vector<16x1xf32> to vector<16x64xf32>
    %73 = arith.subf %56, %72 : vector<16x64xf32>
    %cst_28 = arith.constant 9.99999974E-6 : f32
    %74 = vector.broadcast %cst_28 : f32 to vector<16x1xf32>
    %75 = arith.addf %71, %74 : vector<16x1xf32>
    %76 = math.rsqrt %75 : vector<16x1xf32>
    %77 = vector.broadcast %76 : vector<16x1xf32> to vector<16x64xf32>
    %78 = arith.mulf %73, %77 : vector<16x64xf32>
    %79 = vector.broadcast %58 : vector<1x64xf32> to vector<16x64xf32>
    %80 = arith.mulf %78, %79 : vector<16x64xf32>
    %81 = vector.broadcast %60 : vector<1x64xf32> to vector<16x64xf32>
    %82 = arith.addf %80, %81 : vector<16x64xf32>
    %83 = vector.extract_strided_slice %8 {offsets = [0, 64], sizes = [64, 64], strides = [1, 1]} : vector<64x128xf32> to vector<64x64xf32>
    %cst_29 = arith.constant dense<0.000000e+00> : vector<16x64xf32>
    %84 = tpu.matmul %82, %83, %cst_29 {dimension_numbers = #tpu.dot_dimension_numbers<[1], [0], [0], [1], [0, 0, 1, 1], [], []>} : vector<16x64xf32>, vector<64x64xf32>, vector<16x64xf32> -> vector<16x64xf32>
    %c8 = arith.constant 8 : index
    %c0_30 = arith.constant 0 : index
    %85 = vector.load %arg2[%c8, %c0_30] : memref<16x128xf32, #tpu.memory_space<vmem>>, vector<1x128xf32>
    %86 = vector.extract_strided_slice %85 {offsets = [0, 0], sizes = [1, 64], strides = [1, 1]} : vector<1x128xf32> to vector<1x64xf32>
    %87 = vector.broadcast %86 : vector<1x64xf32> to vector<16x64xf32>
    %88 = arith.addf %84, %87 : vector<16x64xf32>
    %89 = arith.addf %82, %88 : vector<16x64xf32>
    %c11 = arith.constant 11 : index
    %c0_31 = arith.constant 0 : index
    %90 = vector.load %arg2[%c11, %c0_31] : memref<16x128xf32, #tpu.memory_space<vmem>>, vector<1x128xf32>
    %91 = vector.extract_strided_slice %90 {offsets = [0, 0], sizes = [1, 64], strides = [1, 1]} : vector<1x128xf32> to vector<1x64xf32>
    %c12 = arith.constant 12 : index
    %c0_32 = arith.constant 0 : index
    %92 = vector.load %arg2[%c12, %c0_32] : memref<16x128xf32, #tpu.memory_space<vmem>>, vector<1x128xf32>
    %93 = vector.extract_strided_slice %92 {offsets = [0, 0], sizes = [1, 64], strides = [1, 1]} : vector<1x128xf32> to vector<1x64xf32>
    %cst_33 = arith.constant dense<0.000000e+00> : vector<16xf32>
    %94 = vector.multi_reduction <add>, %89, %cst_33 [1] : vector<16x64xf32> to vector<16xf32>
    %95 = vector.shape_cast %94 : vector<16xf32> to vector<16x1xf32>
    %cst_34 = arith.constant 6.400000e+01 : f32
    %96 = vector.broadcast %cst_34 : f32 to vector<16x1xf32>
    %97 = arith.divf %95, %96 : vector<16x1xf32>
    %98 = vector.broadcast %97 : vector<16x1xf32> to vector<16x64xf32>
    %99 = arith.subf %89, %98 : vector<16x64xf32>
    %100 = arith.mulf %99, %99 : vector<16x64xf32>
    %cst_35 = arith.constant dense<0.000000e+00> : vector<16xf32>
    %101 = vector.multi_reduction <add>, %100, %cst_35 [1] : vector<16x64xf32> to vector<16xf32>
    %102 = vector.shape_cast %101 : vector<16xf32> to vector<16x1xf32>
    %cst_36 = arith.constant 6.400000e+01 : f32
    %103 = vector.broadcast %cst_36 : f32 to vector<16x1xf32>
    %104 = arith.divf %102, %103 : vector<16x1xf32>
    %105 = vector.broadcast %97 : vector<16x1xf32> to vector<16x64xf32>
    %106 = arith.subf %89, %105 : vector<16x64xf32>
    %cst_37 = arith.constant 9.99999974E-6 : f32
    %107 = vector.broadcast %cst_37 : f32 to vector<16x1xf32>
    %108 = arith.addf %104, %107 : vector<16x1xf32>
    %109 = math.rsqrt %108 : vector<16x1xf32>
    %110 = vector.broadcast %109 : vector<16x1xf32> to vector<16x64xf32>
    %111 = arith.mulf %106, %110 : vector<16x64xf32>
    %112 = vector.broadcast %91 : vector<1x64xf32> to vector<16x64xf32>
    %113 = arith.mulf %111, %112 : vector<16x64xf32>
    %114 = vector.broadcast %93 : vector<1x64xf32> to vector<16x64xf32>
    %115 = arith.addf %113, %114 : vector<16x64xf32>
    %c144 = arith.constant 144 : index
    %c0_38 = arith.constant 0 : index
    %116 = vector.load %arg1[%c144, %c0_38] : memref<400x128xf32, #tpu.memory_space<vmem>>, vector<64x128xf32>
    %cst_39 = arith.constant dense<0.000000e+00> : vector<16x128xf32>
    %117 = tpu.matmul %115, %116, %cst_39 {dimension_numbers = #tpu.dot_dimension_numbers<[1], [0], [0], [1], [0, 0, 1, 1], [], []>} : vector<16x64xf32>, vector<64x128xf32>, vector<16x128xf32> -> vector<16x128xf32>
    %c9 = arith.constant 9 : index
    %c0_40 = arith.constant 0 : index
    %118 = vector.load %arg2[%c9, %c0_40] : memref<16x128xf32, #tpu.memory_space<vmem>>, vector<1x128xf32>
    %119 = vector.broadcast %118 : vector<1x128xf32> to vector<16x128xf32>
    %120 = arith.addf %117, %119 : vector<16x128xf32>
    %cst_41 = arith.constant 0.000000e+00 : f32
    %121 = vector.broadcast %cst_41 : f32 to vector<16x128xf32>
    %122 = arith.maximumf %120, %121 : vector<16x128xf32>
    %123 = vector.extract_strided_slice %9 {offsets = [0, 64], sizes = [128, 64], strides = [1, 1]} : vector<128x128xf32> to vector<128x64xf32>
    %cst_42 = arith.constant dense<0.000000e+00> : vector<16x64xf32>
    %124 = tpu.matmul %122, %123, %cst_42 {dimension_numbers = #tpu.dot_dimension_numbers<[1], [0], [0], [1], [0, 0, 1, 1], [], []>} : vector<16x128xf32>, vector<128x64xf32>, vector<16x64xf32> -> vector<16x64xf32>
    %c10 = arith.constant 10 : index
    %c0_43 = arith.constant 0 : index
    %125 = vector.load %arg2[%c10, %c0_43] : memref<16x128xf32, #tpu.memory_space<vmem>>, vector<1x128xf32>
    %126 = vector.extract_strided_slice %125 {offsets = [0, 0], sizes = [1, 64], strides = [1, 1]} : vector<1x128xf32> to vector<1x64xf32>
    %127 = vector.broadcast %126 : vector<1x64xf32> to vector<16x64xf32>
    %128 = arith.addf %124, %127 : vector<16x64xf32>
    %129 = arith.addf %115, %128 : vector<16x64xf32>
    %c13 = arith.constant 13 : index
    %c0_44 = arith.constant 0 : index
    %130 = vector.load %arg2[%c13, %c0_44] : memref<16x128xf32, #tpu.memory_space<vmem>>, vector<1x128xf32>
    %131 = vector.extract_strided_slice %130 {offsets = [0, 0], sizes = [1, 64], strides = [1, 1]} : vector<1x128xf32> to vector<1x64xf32>
    %c14 = arith.constant 14 : index
    %c0_45 = arith.constant 0 : index
    %132 = vector.load %arg2[%c14, %c0_45] : memref<16x128xf32, #tpu.memory_space<vmem>>, vector<1x128xf32>
    %133 = vector.extract_strided_slice %132 {offsets = [0, 0], sizes = [1, 64], strides = [1, 1]} : vector<1x128xf32> to vector<1x64xf32>
    %cst_46 = arith.constant dense<0.000000e+00> : vector<16xf32>
    %134 = vector.multi_reduction <add>, %129, %cst_46 [1] : vector<16x64xf32> to vector<16xf32>
    %135 = vector.shape_cast %134 : vector<16xf32> to vector<16x1xf32>
    %cst_47 = arith.constant 6.400000e+01 : f32
    %136 = vector.broadcast %cst_47 : f32 to vector<16x1xf32>
    %137 = arith.divf %135, %136 : vector<16x1xf32>
    %138 = vector.broadcast %137 : vector<16x1xf32> to vector<16x64xf32>
    %139 = arith.subf %129, %138 : vector<16x64xf32>
    %140 = arith.mulf %139, %139 : vector<16x64xf32>
    %cst_48 = arith.constant dense<0.000000e+00> : vector<16xf32>
    %141 = vector.multi_reduction <add>, %140, %cst_48 [1] : vector<16x64xf32> to vector<16xf32>
    %142 = vector.shape_cast %141 : vector<16xf32> to vector<16x1xf32>
    %cst_49 = arith.constant 6.400000e+01 : f32
    %143 = vector.broadcast %cst_49 : f32 to vector<16x1xf32>
    %144 = arith.divf %142, %143 : vector<16x1xf32>
    %145 = vector.broadcast %137 : vector<16x1xf32> to vector<16x64xf32>
    %146 = arith.subf %129, %145 : vector<16x64xf32>
    %cst_50 = arith.constant 9.99999974E-6 : f32
    %147 = vector.broadcast %cst_50 : f32 to vector<16x1xf32>
    %148 = arith.addf %144, %147 : vector<16x1xf32>
    %149 = math.rsqrt %148 : vector<16x1xf32>
    %150 = vector.broadcast %149 : vector<16x1xf32> to vector<16x64xf32>
    %151 = arith.mulf %146, %150 : vector<16x64xf32>
    %152 = vector.broadcast %131 : vector<1x64xf32> to vector<16x64xf32>
    %153 = arith.mulf %151, %152 : vector<16x64xf32>
    %154 = vector.broadcast %133 : vector<1x64xf32> to vector<16x64xf32>
    %155 = arith.addf %153, %154 : vector<16x64xf32>
    %c336 = arith.constant 336 : index
    %c0_51 = arith.constant 0 : index
    %156 = vector.load %arg1[%c336, %c0_51] : memref<400x128xf32, #tpu.memory_space<vmem>>, vector<64x128xf32>
    %cst_52 = arith.constant dense<0.000000e+00> : vector<16x128xf32>
    %157 = tpu.matmul %155, %156, %cst_52 {dimension_numbers = #tpu.dot_dimension_numbers<[1], [0], [0], [1], [0, 0, 1, 1], [], []>} : vector<16x64xf32>, vector<64x128xf32>, vector<16x128xf32> -> vector<16x128xf32>
    %c15 = arith.constant 15 : index
    %c0_53 = arith.constant 0 : index
    %158 = vector.load %arg2[%c15, %c0_53] : memref<16x128xf32, #tpu.memory_space<vmem>>, vector<1x128xf32>
    %159 = vector.broadcast %158 : vector<1x128xf32> to vector<16x128xf32>
    %160 = arith.addf %157, %159 : vector<16x128xf32>
    %c0_54 = arith.constant 0 : index
    %c0_55 = arith.constant 0 : index
    %161 = vector.load %arg3[%c0_54, %c0_55] : memref<16x128xf32, #tpu.memory_space<vmem>>, vector<16x128xf32>
    tpu.vector_store %arg3[%c0_54, %c0_55], %160 {strides = array<i32>} : memref<16x128xf32, #tpu.memory_space<vmem>>, vector<16x128xf32>,
    return
  }
}

</mosaic_0001>

<llo_original>
// kernel: simple_transformer_forward.1
$region0: #{simple_transformer_forward.1}
  #allocation0 [shape = 'u32[]', space=smem, size = 0x4, offset = 0x4, fixed_abs, tag = 'smem constant byte address 0x4 - core index']
  #allocation1 [shape = 'u32[144,128]{1,0:T(1,128)}', space=vmem, size = 0x12000, scoped, tag = 'internal scratch']
  %s0 = inlined_call_operand.hbm [shape: f32[16,16], index: 0, kind: input, shape index: {}]
  %s1 = inlined_call_operand.hbm [shape: f32[400,128], index: 1, kind: input, shape index: {}]
  %s2 = inlined_call_operand.hbm [shape: f32[16,128], index: 2, kind: input, shape index: {}]
  %s3 = inlined_call_operand.vmem [shape: f32[16,128], index: 3, kind: output, shape index: {}]
  %s4 = sld [smem:[#allocation0]]
  $region34: #{simple_transformer_forward.1} parent=0
    _
  %s6 = ssub.s32 1, %s4
  %s7 = scalar_select 0, %s6, %s4
  $region1: #{simple_transformer_forward.1} parent=0
    #allocation2 [shape = 'u8[8192]{0}', space=vmem, size = 0x2000, scoped, tag = 'input window, operand 0, single buffered']
    #allocation3 [shape = 's32[1]{0}', space=sflag, size = 0x4, scoped, tag = 'scoped memory for simple_transformer_forward.1']
    #allocation4 [shape = 'u8[204800]{0}', space=vmem, size = 0x32000, scoped, tag = 'input window, operand 1, single buffered']
    #allocation5 [shape = 's32[1]{0}', space=sflag, size = 0x4, scoped, tag = 'scoped memory for simple_transformer_forward.1']
    #allocation6 [shape = 'u8[8192]{0}', space=vmem, size = 0x2000, scoped, tag = 'input window, operand 2, single buffered']
    %8 = vsyncpa [#allocation3], 0
    %9 = vsyncpa [#allocation5], 0
    // Predicated region
    $region2: #{simple_transformer_forward.1} parent=1 // pred_check
      _
    $region3: #{simple_transformer_forward.1} parent=1 // pred_check_branch
      %11 = sbr.rel (0) target = $region5
    $region4: #{simple_transformer_forward.1} parent=1 // pred_region
      %s13 = ssub.s32 256, 256
      %14 = vsyncadd [#allocation3], %s13
      %s15 = sshll.u32 [#allocation2], 4
      %s16 = int_to_ptr.vmem [resolvable:$true] %s15
      %21 = dma.hbm_to_vmem [thread:$0]  %s0, 256, %s16, [#allocation3], 128, 128, 8
    $region5: #{simple_transformer_forward.1} parent=1 // pred_fallthru
      _
    // Predicated region
    $region6: #{simple_transformer_forward.1} parent=1 // pred_check
      _
    $region7: #{simple_transformer_forward.1} parent=1 // pred_check_branch
      %23 = sbr.rel (0) target = $region9
    $region8: #{simple_transformer_forward.1} parent=1 // pred_region
      %s25 = ssub.s32 6400, 6400
      %26 = vsyncadd [#allocation5], %s25
      %s27 = sshll.u32 [#allocation4], 4
      %s28 = int_to_ptr.vmem [resolvable:$true] %s27
      %33 = dma.hbm_to_vmem [thread:$0]  %s1, 6400, %s28, [#allocation5], 128, 128, 8
    $region9: #{simple_transformer_forward.1} parent=1 // pred_fallthru
      _
    // Predicated region
    $region10: #{simple_transformer_forward.1} parent=1 // pred_check
      _
    $region11: #{simple_transformer_forward.1} parent=1 // pred_check_branch
      %35 = sbr.rel (0) target = $region13
    $region12: #{simple_transformer_forward.1} parent=1 // pred_region
      %s37 = ssub.s32 256, 256
      %38 = vsyncadd [#allocation5], %s37
      %s39 = sshll.u32 [#allocation6], 4
      %s40 = int_to_ptr.vmem [resolvable:$true] %s39
      %45 = dma.hbm_to_vmem [thread:$0]  %s2, 256, %s40, [#allocation5], 128, 128, 8
    $region13: #{simple_transformer_forward.1} parent=1 // pred_fallthru
      _
    // Predicated region
    $region14: #{simple_transformer_forward.1} parent=1 // pred_check
      _
    $region15: #{simple_transformer_forward.1} parent=1 // pred_check_branch
      %47 = sbr.rel (0) target = $region17
    $region16: #{simple_transformer_forward.1} parent=1 // pred_region
      %48 = dma.done [#allocation3], 256
    $region17: #{simple_transformer_forward.1} parent=1 // pred_fallthru
      _
    // Predicated region
    $region18: #{simple_transformer_forward.1} parent=1 // pred_check
      _
    $region19: #{simple_transformer_forward.1} parent=1 // pred_check_branch
      %50 = sbr.rel (0) target = $region21
    $region20: #{simple_transformer_forward.1} parent=1 // pred_region
      %51 = dma.done [#allocation5], 6400
    $region21: #{simple_transformer_forward.1} parent=1 // pred_fallthru
      _
    // Predicated region
    $region22: #{simple_transformer_forward.1} parent=1 // pred_check
      _
    $region23: #{simple_transformer_forward.1} parent=1 // pred_check_branch
      %53 = sbr.rel (0) target = $region25
    $region24: #{simple_transformer_forward.1} parent=1 // pred_region
      %54 = dma.done [#allocation5], 256
    $region25: #{simple_transformer_forward.1} parent=1 // pred_fallthru
      _
    %v55 = vld [vmem:[#allocation2] sm:$0xff]
    %v56 = vld [vmem:[#allocation2 + $0x8] sm:$0xff]
    %v57 = vld [vmem:[#allocation4] sm:$0xff]
    %v58 = vld [vmem:[#allocation4 + $0x8] sm:$0xff]
    %v59 = vld [vmem:[#allocation6] sm:$0x1]
    %v60 = vlaneseq
    %v61 = vshrl.u32 %v60, 7
    %v62 = vsub.s32 0, %v61
    %v63 = vrot.slane %v59, %v62
    %vm64 = vcmask 130048
    %v66 = vsel %vm64, %v55, 0
    %v69 = vsel %vm64, %v56, 0
    %71 = vmatprep.subr.mxu0 0.0
    %72 = vmatpush1.msra.mxu0 %v57
    %73 = vmatprep.subr.mxu0 0.0
    %74 = vmatpush1.msra.mxu0 %v58
    %75 = vmatprep.subr.mxu0 0.0
    %76 = vmatpush1.msra.mxu0 0.0
    %77 = vmatprep.subr.mxu0 0.0
    %78 = vmatpush1.msra.mxu0 0.0
    %79 = vmatprep.subr.mxu0 0.0
    %80 = vmatpush1.msra.mxu0 0.0
    %81 = vmatprep.subr.mxu0 0.0
    %82 = vmatpush1.msra.mxu0 0.0
    %83 = vmatprep.subr.mxu0 0.0
    %84 = vmatpush1.msra.mxu0 0.0
    %85 = vmatprep.subr.mxu0 0.0
    %86 = vmatpush1.msra.mxu0 0.0
    %87 = vmatprep.subr.mxu0 0.0
    %88 = vmatpush1.msra.mxu0 0.0
    %89 = vmatprep.subr.mxu0 0.0
    %90 = vmatpush1.msra.mxu0 0.0
    %91 = vmatprep.subr.mxu0 0.0
    %92 = vmatpush1.msra.mxu0 0.0
    %93 = vmatprep.subr.mxu0 0.0
    %94 = vmatpush1.msra.mxu0 0.0
    %95 = vmatprep.subr.mxu0 0.0
    %96 = vmatpush1.msra.mxu0 0.0
    %97 = vmatprep.subr.mxu0 0.0
    %98 = vmatpush1.msra.mxu0 0.0
    %99 = vmatprep.subr.mxu0 0.0
    %100 = vmatpush1.msra.mxu0 0.0
    %101 = vmatprep.subr.mxu0 0.0
    %102 = vmatpush1.msra.mxu0 0.0
    %103 = vmatprep.subr.mxu0 0.0
    %104 = vmatpush1.msra.mxu0 0.0
    %105 = vmatprep.subr.mxu0 0.0
    %106 = vmatpush1.msra.mxu0 0.0
    %107 = vmatprep.subr.mxu0 0.0
    %108 = vmatpush1.msra.mxu0 0.0
    %109 = vmatprep.subr.mxu0 0.0
    %110 = vmatpush1.msra.mxu0 0.0
    %111 = vmatprep.subr.mxu0 0.0
    %112 = vmatpush1.msra.mxu0 0.0
    %113 = vmatprep.subr.mxu0 0.0
    %114 = vmatpush1.msra.mxu0 0.0
    %115 = vmatprep.subr.mxu0 0.0
    %116 = vmatpush1.msra.mxu0 0.0
    %117 = vmatprep.subr.mxu0 0.0
    %118 = vmatpush1.msra.mxu0 0.0
    %119 = vmatprep.subr.mxu0 0.0
    %120 = vmatpush1.msra.mxu0 0.0
    %121 = vmatprep.subr.mxu0 0.0
    %122 = vmatpush1.msra.mxu0 0.0
    %123 = vmatprep.subr.mxu0 0.0
    %124 = vmatpush1.msra.mxu0 0.0
    %125 = vmatprep.subr.mxu0 0.0
    %126 = vmatpush1.msra.mxu0 0.0
    %127 = vmatprep.subr.mxu0 0.0
    %128 = vmatpush1.msra.mxu0 0.0
    %129 = vmatprep.subr.mxu0 0.0
    %130 = vmatpush1.msra.mxu0 0.0
    %131 = vmatprep.subr.mxu0 0.0
    %132 = vmatpush1.msra.mxu0 0.0
    %133 = vmatprep.subr.mxu0 0.0
    %134 = vmatpush1.msra.mxu0 0.0
    %135 = vmatprep.mubr.f32.mxu0 0.0
    %136 = vmatmul.mubr.f32.gmra.mrb[0].mxu0 %v66
    %v137 = vpop.f32.mrb[0].mxu0
    %v138 = vadd.f32 %v63, %v137
    %v139 = vpop.f32.mrb[0].mxu0
    %140 = vmatprep.mubr.f32.mxu0 0.0
    %141 = vmatmul.mubr.f32.gmra.mrb[0].mxu0 %v69
    %v142 = vpop.f32.mrb[0].mxu0
    %v143 = vadd.f32 %v63, %v142
    %v144 = vpop.f32.mrb[0].mxu0
    %145 = vdwg.mxu0
    %v146 = vld [vmem:[#allocation4 + $0x10] sm:$0xff]
    %v147 = vld [vmem:[#allocation4 + $0x18] sm:$0xff]
    %v148 = vld [vmem:[#allocation4 + $0x20] sm:$0xff]
    %v149 = vld [vmem:[#allocation4 + $0x28] sm:$0xff]
    %v150 = vld [vmem:[#allocation4 + $0x30] sm:$0xff]
    %v151 = vld [vmem:[#allocation4 + $0x38] sm:$0xff]
    %v152 = vld [vmem:[#allocation4 + $0x40] sm:$0xff]
    %v153 = vld [vmem:[#allocation4 + $0x48] sm:$0xff]
    %v154 = vld [vmem:[#allocation4 + $0xd0] sm:$0xff]
    %v155 = vld [vmem:[#allocation4 + $0xd8] sm:$0xff]
    %v156 = vld [vmem:[#allocation4 + $0xe0] sm:$0xff]
    %v157 = vld [vmem:[#allocation4 + $0xe8] sm:$0xff]
    %v158 = vld [vmem:[#allocation4 + $0xf0] sm:$0xff]
    %v159 = vld [vmem:[#allocation4 + $0xf8] sm:$0xff]
    %v160 = vld [vmem:[#allocation4 + $0x100] sm:$0xff]
    %v161 = vld [vmem:[#allocation4 + $0x108] sm:$0xff]
    %v162 = vld [vmem:[#allocation4 + $0x110] sm:$0xff]
    %v163 = vld [vmem:[#allocation4 + $0x118] sm:$0xff]
    %v164 = vld [vmem:[#allocation4 + $0x120] sm:$0xff]
    %v165 = vld [vmem:[#allocation4 + $0x128] sm:$0xff]
    %v166 = vld [vmem:[#allocation4 + $0x130] sm:$0xff]
    %v167 = vld [vmem:[#allocation4 + $0x138] sm:$0xff]
    %v168 = vld [vmem:[#allocation4 + $0x140] sm:$0xff]
    %v169 = vld [vmem:[#allocation4 + $0x148] sm:$0xff]
    %v170 = vld [vmem:[#allocation6 + $0x1] sm:$0x1]
    %v171 = vlaneseq
    %v172 = vshrl.u32 %v171, 7
    %v173 = vsub.s32 0, %v172
    %v174 = vrot.slane %v170, %v173
    %vm175 = vcmask 523264
    %v177 = vsel %vm175, %v138, 0
    %v180 = vsel %vm175, %v143, 0
    %182 = vmatprep.subr.mxu0 0.0
    %183 = vmatpush1.msra.mxu0 %v146
    %184 = vmatprep.subr.mxu0 0.0
    %185 = vmatpush1.msra.mxu0 %v147
    %186 = vmatprep.subr.mxu0 0.0
    %187 = vmatpush1.msra.mxu0 %v148
    %188 = vmatprep.subr.mxu0 0.0
    %189 = vmatpush1.msra.mxu0 %v149
    %190 = vmatprep.subr.mxu0 0.0
    %191 = vmatpush1.msra.mxu0 %v150
    %192 = vmatprep.subr.mxu0 0.0
    %193 = vmatpush1.msra.mxu0 %v151
    %194 = vmatprep.subr.mxu0 0.0
    %195 = vmatpush1.msra.mxu0 %v152
    %196 = vmatprep.subr.mxu0 0.0
    %197 = vmatpush1.msra.mxu0 %v153
    %198 = vmatprep.subr.mxu0 0.0
    %199 = vmatpush1.msra.mxu0 0.0
    %200 = vmatprep.subr.mxu0 0.0
    %201 = vmatpush1.msra.mxu0 0.0
    %202 = vmatprep.subr.mxu0 0.0
    %203 = vmatpush1.msra.mxu0 0.0
    %204 = vmatprep.subr.mxu0 0.0
    %205 = vmatpush1.msra.mxu0 0.0
    %206 = vmatprep.subr.mxu0 0.0
    %207 = vmatpush1.msra.mxu0 0.0
    %208 = vmatprep.subr.mxu0 0.0
    %209 = vmatpush1.msra.mxu0 0.0
    %210 = vmatprep.subr.mxu0 0.0
    %211 = vmatpush1.msra.mxu0 0.0
    %212 = vmatprep.subr.mxu0 0.0
    %213 = vmatpush1.msra.mxu0 0.0
    %214 = vmatprep.subr.mxu0 0.0
    %215 = vmatpush1.msra.mxu0 0.0
    %216 = vmatprep.subr.mxu0 0.0
    %217 = vmatpush1.msra.mxu0 0.0
    %218 = vmatprep.subr.mxu0 0.0
    %219 = vmatpush1.msra.mxu0 0.0
    %220 = vmatprep.subr.mxu0 0.0
    %221 = vmatpush1.msra.mxu0 0.0
    %222 = vmatprep.subr.mxu0 0.0
    %223 = vmatpush1.msra.mxu0 0.0
    %224 = vmatprep.subr.mxu0 0.0
    %225 = vmatpush1.msra.mxu0 0.0
    %226 = vmatprep.subr.mxu0 0.0
    %227 = vmatpush1.msra.mxu0 0.0
    %228 = vmatprep.subr.mxu0 0.0
    %229 = vmatpush1.msra.mxu0 0.0
    %230 = vmatprep.subr.mxu0 0.0
    %231 = vmatpush1.msra.mxu0 0.0
    %232 = vmatprep.subr.mxu0 0.0
    %233 = vmatpush1.msra.mxu0 0.0
    %234 = vmatprep.subr.mxu0 0.0
    %235 = vmatpush1.msra.mxu0 0.0
    %236 = vmatprep.subr.mxu0 0.0
    %237 = vmatpush1.msra.mxu0 0.0
    %238 = vmatprep.subr.mxu0 0.0
    %239 = vmatpush1.msra.mxu0 0.0
    %240 = vmatprep.subr.mxu0 0.0
    %241 = vmatpush1.msra.mxu0 0.0
    %242 = vmatprep.subr.mxu0 0.0
    %243 = vmatpush1.msra.mxu0 0.0
    %244 = vmatprep.subr.mxu0 0.0
    %245 = vmatpush1.msra.mxu0 0.0
    %246 = vmatprep.mubr.f32.mxu0 0.0
    %247 = vmatmul.mubr.f32.gmra.mrb[0].mxu0 %v177
    %v248 = vpop.f32.mrb[0].mxu0
    %v249 = vadd.f32 %v174, %v248
    %v250 = vpop.f32.mrb[0].mxu0
    %251 = vmatprep.mubr.f32.mxu0 0.0
    %252 = vmatmul.mubr.f32.gmra.mrb[0].mxu0 %v180
    %v253 = vpop.f32.mrb[0].mxu0
    %v254 = vadd.f32 %v174, %v253
    %v255 = vpop.f32.mrb[0].mxu0
    %256 = vdwg.mxu0
    %v257 = vadd.f32 %v138, %v249
    %v258 = vadd.f32 %v143, %v254
    %v259 = vld [vmem:[#allocation6 + $0x4] sm:$0x1]
    %v260 = vld [vmem:[#allocation6 + $0x5] sm:$0x1]
    %v261 = vsel %vm175, %v257, 0.0
    %262 = vadd.xlane.f32.xlu0 %v261
    %v263 = vpop.xlane.xlu0 %262
    %v264 = vsel %vm175, %v258, 0.0
    %265 = vadd.xlane.f32.xlu0 %v264
    %v266 = vpop.xlane.xlu0 %265
    %v267 = vrcp.pop 64.0
    %v268 = vmul.f32 %v263, %v267
    %v269 = vmul.f32 %v266, %v267
    %v270 = vsub.f32 %v257, %v268
    %v271 = vsub.f32 %v258, %v269
    %v272 = vmul.f32 %v270, %v270
    %v273 = vmul.f32 %v271, %v271
    %v274 = vsel %vm175, %v272, 0.0
    %275 = vadd.xlane.f32.xlu0 %v274
    %v276 = vpop.xlane.xlu0 %275
    %v277 = vsel %vm175, %v273, 0.0
    %278 = vadd.xlane.f32.xlu0 %v277
    %v279 = vpop.xlane.xlu0 %278
    %v280 = vmul.f32 %v276, %v267
    %v281 = vmul.f32 %v279, %v267
    %v282 = vadd.f32 %v280, 1e-05
    %v283 = vadd.f32 %v281, 1e-05
    %v284 = vrsqrt.pop %v282
    %v285 = vrsqrt.pop %v283
    %v286 = vmul.f32 %v270, %v284
    %v287 = vmul.f32 %v271, %v285
    %v288 = vlaneseq
    %v289 = vshrl.u32 %v288, 7
    %v290 = vsub.s32 0, %v289
    %v291 = vrot.slane %v259, %v290
    %v292 = vmul.f32 %v286, %v291
    %v293 = vmul.f32 %v287, %v291
    %v294 = vlaneseq
    %v295 = vshrl.u32 %v294, 7
    %v296 = vsub.s32 0, %v295
    %v297 = vrot.slane %v260, %v296
    %v298 = vadd.f32 %v292, %v297
    %v299 = vadd.f32 %v293, %v297
    %v300 = vld [vmem:[#allocation4 + $0x50] sm:$0xff]
    %v301 = vld [vmem:[#allocation4 + $0x58] sm:$0xff]
    %v302 = vld [vmem:[#allocation4 + $0x60] sm:$0xff]
    %v303 = vld [vmem:[#allocation4 + $0x68] sm:$0xff]
    %v304 = vld [vmem:[#allocation4 + $0x70] sm:$0xff]
    %v305 = vld [vmem:[#allocation4 + $0x78] sm:$0xff]
    %v306 = vld [vmem:[#allocation4 + $0x80] sm:$0xff]
    %v307 = vld [vmem:[#allocation4 + $0x88] sm:$0xff]
    %v308 = vld [vmem:[#allocation6 + $0x2] sm:$0x1]
    %v309 = vlaneseq
    %v310 = vshrl.u32 %v309, 7
    %v311 = vsub.s32 0, %v310
    %v312 = vrot.slane %v308, %v311
    %v314 = vsel %vm175, %v298, 0
    %v317 = vsel %vm175, %v299, 0
    %319 = vmatprep.subr.mxu0 0.0
    %320 = vmatpush1.msra.mxu0 %v300
    %321 = vmatprep.subr.mxu0 0.0
    %322 = vmatpush1.msra.mxu0 %v301
    %323 = vmatprep.subr.mxu0 0.0
    %324 = vmatpush1.msra.mxu0 %v302
    %325 = vmatprep.subr.mxu0 0.0
    %326 = vmatpush1.msra.mxu0 %v303
    %327 = vmatprep.subr.mxu0 0.0
    %328 = vmatpush1.msra.mxu0 %v304
    %329 = vmatprep.subr.mxu0 0.0
    %330 = vmatpush1.msra.mxu0 %v305
    %331 = vmatprep.subr.mxu0 0.0
    %332 = vmatpush1.msra.mxu0 %v306
    %333 = vmatprep.subr.mxu0 0.0
    %334 = vmatpush1.msra.mxu0 %v307
    %335 = vmatprep.subr.mxu0 0.0
    %336 = vmatpush1.msra.mxu0 0.0
    %337 = vmatprep.subr.mxu0 0.0
    %338 = vmatpush1.msra.mxu0 0.0
    %339 = vmatprep.subr.mxu0 0.0
    %340 = vmatpush1.msra.mxu0 0.0
    %341 = vmatprep.subr.mxu0 0.0
    %342 = vmatpush1.msra.mxu0 0.0
    %343 = vmatprep.subr.mxu0 0.0
    %344 = vmatpush1.msra.mxu0 0.0
    %345 = vmatprep.subr.mxu0 0.0
    %346 = vmatpush1.msra.mxu0 0.0
    %347 = vmatprep.subr.mxu0 0.0
    %348 = vmatpush1.msra.mxu0 0.0
    %349 = vmatprep.subr.mxu0 0.0
    %350 = vmatpush1.msra.mxu0 0.0
    %351 = vmatprep.subr.mxu0 0.0
    %352 = vmatpush1.msra.mxu0 0.0
    %353 = vmatprep.subr.mxu0 0.0
    %354 = vmatpush1.msra.mxu0 0.0
    %355 = vmatprep.subr.mxu0 0.0
    %356 = vmatpush1.msra.mxu0 0.0
    %357 = vmatprep.subr.mxu0 0.0
    %358 = vmatpush1.msra.mxu0 0.0
    %359 = vmatprep.subr.mxu0 0.0
    %360 = vmatpush1.msra.mxu0 0.0
    %361 = vmatprep.subr.mxu0 0.0
    %362 = vmatpush1.msra.mxu0 0.0
    %363 = vmatprep.subr.mxu0 0.0
    %364 = vmatpush1.msra.mxu0 0.0
    %365 = vmatprep.subr.mxu0 0.0
    %366 = vmatpush1.msra.mxu0 0.0
    %367 = vmatprep.subr.mxu0 0.0
    %368 = vmatpush1.msra.mxu0 0.0
    %369 = vmatprep.subr.mxu0 0.0
    %370 = vmatpush1.msra.mxu0 0.0
    %371 = vmatprep.subr.mxu0 0.0
    %372 = vmatpush1.msra.mxu0 0.0
    %373 = vmatprep.subr.mxu0 0.0
    %374 = vmatpush1.msra.mxu0 0.0
    %375 = vmatprep.subr.mxu0 0.0
    %376 = vmatpush1.msra.mxu0 0.0
    %377 = vmatprep.subr.mxu0 0.0
    %378 = vmatpush1.msra.mxu0 0.0
    %379 = vmatprep.subr.mxu0 0.0
    %380 = vmatpush1.msra.mxu0 0.0
    %381 = vmatprep.subr.mxu0 0.0
    %382 = vmatpush1.msra.mxu0 0.0
    %383 = vmatprep.mubr.f32.mxu0 0.0
    %384 = vmatmul.mubr.f32.gmra.mrb[0].mxu0 %v314
    %v385 = vpop.f32.mrb[0].mxu0
    %v386 = vadd.f32 %v312, %v385
    %v387 = vpop.f32.mrb[0].mxu0
    %388 = vmatprep.mubr.f32.mxu0 0.0
    %389 = vmatmul.mubr.f32.gmra.mrb[0].mxu0 %v317
    %v390 = vpop.f32.mrb[0].mxu0
    %v391 = vadd.f32 %v312, %v390
    %v392 = vpop.f32.mrb[0].mxu0
    %393 = vdwg.mxu0
    %v394 = vmax.f32 %v386, 0.0
    %v395 = vmax.f32 %v391, 0.0
    %v396 = vld [vmem:[#allocation6 + $0x3] sm:$0x1]
    %v397 = vlaneseq
    %v398 = vshrl.u32 %v397, 7
    %v399 = vsub.s32 0, %v398
    %v400 = vrot.slane %v396, %v399
    %401 = vmatprep.subr.mxu0 0.0
    %402 = vmatpush1.msra.mxu0 %v154
    %403 = vmatprep.subr.mxu0 0.0
    %404 = vmatpush1.msra.mxu0 %v155
    %405 = vmatprep.subr.mxu0 0.0
    %406 = vmatpush1.msra.mxu0 %v156
    %407 = vmatprep.subr.mxu0 0.0
    %408 = vmatpush1.msra.mxu0 %v157
    %409 = vmatprep.subr.mxu0 0.0
    %410 = vmatpush1.msra.mxu0 %v158
    %411 = vmatprep.subr.mxu0 0.0
    %412 = vmatpush1.msra.mxu0 %v159
    %413 = vmatprep.subr.mxu0 0.0
    %414 = vmatpush1.msra.mxu0 %v160
    %415 = vmatprep.subr.mxu0 0.0
    %416 = vmatpush1.msra.mxu0 %v161
    %417 = vmatprep.subr.mxu0 0.0
    %418 = vmatpush1.msra.mxu0 %v162
    %419 = vmatprep.subr.mxu0 0.0
    %420 = vmatpush1.msra.mxu0 %v163
    %421 = vmatprep.subr.mxu0 0.0
    %422 = vmatpush1.msra.mxu0 %v164
    %423 = vmatprep.subr.mxu0 0.0
    %424 = vmatpush1.msra.mxu0 %v165
    %425 = vmatprep.subr.mxu0 0.0
    %426 = vmatpush1.msra.mxu0 %v166
    %427 = vmatprep.subr.mxu0 0.0
    %428 = vmatpush1.msra.mxu0 %v167
    %429 = vmatprep.subr.mxu0 0.0
    %430 = vmatpush1.msra.mxu0 %v168
    %431 = vmatprep.subr.mxu0 0.0
    %432 = vmatpush1.msra.mxu0 %v169
    %433 = vmatprep.subr.mxu0 0.0
    %434 = vmatpush1.msra.mxu0 0.0
    %435 = vmatprep.subr.mxu0 0.0
    %436 = vmatpush1.msra.mxu0 0.0
    %437 = vmatprep.subr.mxu0 0.0
    %438 = vmatpush1.msra.mxu0 0.0
    %439 = vmatprep.subr.mxu0 0.0
    %440 = vmatpush1.msra.mxu0 0.0
    %441 = vmatprep.subr.mxu0 0.0
    %442 = vmatpush1.msra.mxu0 0.0
    %443 = vmatprep.subr.mxu0 0.0
    %444 = vmatpush1.msra.mxu0 0.0
    %445 = vmatprep.subr.mxu0 0.0
    %446 = vmatpush1.msra.mxu0 0.0
    %447 = vmatprep.subr.mxu0 0.0
    %448 = vmatpush1.msra.mxu0 0.0
    %449 = vmatprep.subr.mxu0 0.0
    %450 = vmatpush1.msra.mxu0 0.0
    %451 = vmatprep.subr.mxu0 0.0
    %452 = vmatpush1.msra.mxu0 0.0
    %453 = vmatprep.subr.mxu0 0.0
    %454 = vmatpush1.msra.mxu0 0.0
    %455 = vmatprep.subr.mxu0 0.0
    %456 = vmatpush1.msra.mxu0 0.0
    %457 = vmatprep.subr.mxu0 0.0
    %458 = vmatpush1.msra.mxu0 0.0
    %459 = vmatprep.subr.mxu0 0.0
    %460 = vmatpush1.msra.mxu0 0.0
    %461 = vmatprep.subr.mxu0 0.0
    %462 = vmatpush1.msra.mxu0 0.0
    %463 = vmatprep.subr.mxu0 0.0
    %464 = vmatpush1.msra.mxu0 0.0
    %465 = vmatprep.mubr.f32.mxu0 0.0
    %466 = vmatmul.mubr.f32.gmra.mrb[0].mxu0 %v394
    %v467 = vpop.f32.mrb[0].mxu0
    %v468 = vadd.f32 %v400, %v467
    %v469 = vpop.f32.mrb[0].mxu0
    %470 = vmatprep.mubr.f32.mxu0 0.0
    %471 = vmatmul.mubr.f32.gmra.mrb[0].mxu0 %v395
    %v472 = vpop.f32.mrb[0].mxu0
    %v473 = vadd.f32 %v400, %v472
    %v474 = vpop.f32.mrb[0].mxu0
    %475 = vdwg.mxu0
    %v476 = vadd.f32 %v298, %v468
    %v477 = vadd.f32 %v299, %v473
    %v478 = vld [vmem:[#allocation6 + $0x6] sm:$0x1]
    %v479 = vld [vmem:[#allocation6 + $0x7] sm:$0x1]
    %v480 = vsel %vm175, %v476, 0.0
    %481 = vadd.xlane.f32.xlu0 %v480
    %v482 = vpop.xlane.xlu0 %481
    %v483 = vsel %vm175, %v477, 0.0
    %484 = vadd.xlane.f32.xlu0 %v483
    %v485 = vpop.xlane.xlu0 %484
    %v486 = vmul.f32 %v482, %v267
    %v487 = vmul.f32 %v485, %v267
    %v488 = vsub.f32 %v476, %v486
    %v489 = vsub.f32 %v477, %v487
    %v490 = vmul.f32 %v488, %v488
    %v491 = vmul.f32 %v489, %v489
    %v492 = vsel %vm175, %v490, 0.0
    %493 = vadd.xlane.f32.xlu0 %v492
    %v494 = vpop.xlane.xlu0 %493
    %v495 = vsel %vm175, %v491, 0.0
    %496 = vadd.xlane.f32.xlu0 %v495
    %v497 = vpop.xlane.xlu0 %496
    %v498 = vmul.f32 %v494, %v267
    %v499 = vmul.f32 %v497, %v267
    %v500 = vadd.f32 %v498, 1e-05
    %v501 = vadd.f32 %v499, 1e-05
    %v502 = vrsqrt.pop %v500
    %v503 = vrsqrt.pop %v501
    %v504 = vmul.f32 %v488, %v502
    %v505 = vmul.f32 %v489, %v503
    %v506 = vlaneseq
    %v507 = vshrl.u32 %v506, 7
    %v508 = vsub.s32 0, %v507
    %v509 = vrot.slane %v478, %v508
    %v510 = vmul.f32 %v504, %v509
    %v511 = vmul.f32 %v505, %v509
    %v512 = vlaneseq
    %v513 = vshrl.u32 %v512, 7
    %v514 = vsub.s32 0, %v513
    %v515 = vrot.slane %v479, %v514
    %v516 = vadd.f32 %v510, %v515
    %v517 = vadd.f32 %v511, %v515
    %v518 = vld [vmem:[#allocation6 + $0x8] sm:$0x1]
    %v519 = vlaneseq
    %v520 = vshrl.u32 %v519, 7
    %v521 = vsub.s32 0, %v520
    %v522 = vrot.slane %v518, %v521
    %531 = vrot.lane.b32.xlu0 %v146, 64
    %v532 = vpop.permute.xlu0 %531
    %533 = vrot.lane.b32.xlu0 %v147, 64
    %v534 = vpop.permute.xlu0 %533
    %535 = vrot.lane.b32.xlu0 %v148, 64
    %v536 = vpop.permute.xlu0 %535
    %537 = vrot.lane.b32.xlu0 %v149, 64
    %v538 = vpop.permute.xlu0 %537
    %539 = vrot.lane.b32.xlu0 %v150, 64
    %v540 = vpop.permute.xlu0 %539
    %541 = vrot.lane.b32.xlu0 %v151, 64
    %v542 = vpop.permute.xlu0 %541
    %543 = vrot.lane.b32.xlu0 %v152, 64
    %v544 = vpop.permute.xlu0 %543
    %545 = vrot.lane.b32.xlu0 %v153, 64
    %v546 = vpop.permute.xlu0 %545
    %v556 = vsel %vm175, %v516, 0
    %v559 = vsel %vm175, %v517, 0
    %561 = vmatprep.subr.mxu0 0.0
    %562 = vmatpush1.msra.mxu0 %v532
    %563 = vmatprep.subr.mxu0 0.0
    %564 = vmatpush1.msra.mxu0 %v534
    %565 = vmatprep.subr.mxu0 0.0
    %566 = vmatpush1.msra.mxu0 %v536
    %567 = vmatprep.subr.mxu0 0.0
    %568 = vmatpush1.msra.mxu0 %v538
    %569 = vmatprep.subr.mxu0 0.0
    %570 = vmatpush1.msra.mxu0 %v540
    %571 = vmatprep.subr.mxu0 0.0
    %572 = vmatpush1.msra.mxu0 %v542
    %573 = vmatprep.subr.mxu0 0.0
    %574 = vmatpush1.msra.mxu0 %v544
    %575 = vmatprep.subr.mxu0 0.0
    %576 = vmatpush1.msra.mxu0 %v546
    %577 = vmatprep.subr.mxu0 0.0
    %578 = vmatpush1.msra.mxu0 0.0
    %579 = vmatprep.subr.mxu0 0.0
    %580 = vmatpush1.msra.mxu0 0.0
    %581 = vmatprep.subr.mxu0 0.0
    %582 = vmatpush1.msra.mxu0 0.0
    %583 = vmatprep.subr.mxu0 0.0
    %584 = vmatpush1.msra.mxu0 0.0
    %585 = vmatprep.subr.mxu0 0.0
    %586 = vmatpush1.msra.mxu0 0.0
    %587 = vmatprep.subr.mxu0 0.0
    %588 = vmatpush1.msra.mxu0 0.0
    %589 = vmatprep.subr.mxu0 0.0
    %590 = vmatpush1.msra.mxu0 0.0
    %591 = vmatprep.subr.mxu0 0.0
    %592 = vmatpush1.msra.mxu0 0.0
    %593 = vmatprep.subr.mxu0 0.0
    %594 = vmatpush1.msra.mxu0 0.0
    %595 = vmatprep.subr.mxu0 0.0
    %596 = vmatpush1.msra.mxu0 0.0
    %597 = vmatprep.subr.mxu0 0.0
    %598 = vmatpush1.msra.mxu0 0.0
    %599 = vmatprep.subr.mxu0 0.0
    %600 = vmatpush1.msra.mxu0 0.0
    %601 = vmatprep.subr.mxu0 0.0
    %602 = vmatpush1.msra.mxu0 0.0
    %603 = vmatprep.subr.mxu0 0.0
    %604 = vmatpush1.msra.mxu0 0.0
    %605 = vmatprep.subr.mxu0 0.0
    %606 = vmatpush1.msra.mxu0 0.0
    %607 = vmatprep.subr.mxu0 0.0
    %608 = vmatpush1.msra.mxu0 0.0
    %609 = vmatprep.subr.mxu0 0.0
    %610 = vmatpush1.msra.mxu0 0.0
    %611 = vmatprep.subr.mxu0 0.0
    %612 = vmatpush1.msra.mxu0 0.0
    %613 = vmatprep.subr.mxu0 0.0
    %614 = vmatpush1.msra.mxu0 0.0
    %615 = vmatprep.subr.mxu0 0.0
    %616 = vmatpush1.msra.mxu0 0.0
    %617 = vmatprep.subr.mxu0 0.0
    %618 = vmatpush1.msra.mxu0 0.0
    %619 = vmatprep.subr.mxu0 0.0
    %620 = vmatpush1.msra.mxu0 0.0
    %621 = vmatprep.subr.mxu0 0.0
    %622 = vmatpush1.msra.mxu0 0.0
    %623 = vmatprep.subr.mxu0 0.0
    %624 = vmatpush1.msra.mxu0 0.0
    %625 = vmatprep.mubr.f32.mxu0 0.0
    %626 = vmatmul.mubr.f32.gmra.mrb[0].mxu0 %v556
    %v627 = vpop.f32.mrb[0].mxu0
    %v628 = vadd.f32 %v522, %v627
    %v629 = vpop.f32.mrb[0].mxu0
    %630 = vmatprep.mubr.f32.mxu0 0.0
    %631 = vmatmul.mubr.f32.gmra.mrb[0].mxu0 %v559
    %v632 = vpop.f32.mrb[0].mxu0
    %v633 = vadd.f32 %v522, %v632
    %v634 = vpop.f32.mrb[0].mxu0
    %635 = vdwg.mxu0
    %v636 = vadd.f32 %v516, %v628
    %v637 = vadd.f32 %v517, %v633
    %v638 = vld [vmem:[#allocation6 + $0xb] sm:$0x1]
    %v639 = vld [vmem:[#allocation6 + $0xc] sm:$0x1]
    %v640 = vsel %vm175, %v636, 0.0
    %641 = vadd.xlane.f32.xlu0 %v640
    %v642 = vpop.xlane.xlu0 %641
    %v643 = vsel %vm175, %v637, 0.0
    %644 = vadd.xlane.f32.xlu0 %v643
    %v645 = vpop.xlane.xlu0 %644
    %v646 = vmul.f32 %v642, %v267
    %v647 = vmul.f32 %v645, %v267
    %v648 = vsub.f32 %v636, %v646
    %v649 = vsub.f32 %v637, %v647
    %v650 = vmul.f32 %v648, %v648
    %v651 = vmul.f32 %v649, %v649
    %v652 = vsel %vm175, %v650, 0.0
    %653 = vadd.xlane.f32.xlu0 %v652
    %v654 = vpop.xlane.xlu0 %653
    %v655 = vsel %vm175, %v651, 0.0
    %656 = vadd.xlane.f32.xlu0 %v655
    %v657 = vpop.xlane.xlu0 %656
    %v658 = vmul.f32 %v654, %v267
    %v659 = vmul.f32 %v657, %v267
    %v660 = vadd.f32 %v658, 1e-05
    %v661 = vadd.f32 %v659, 1e-05
    %v662 = vrsqrt.pop %v660
    %v663 = vrsqrt.pop %v661
    %v664 = vmul.f32 %v648, %v662
    %v665 = vmul.f32 %v649, %v663
    %v666 = vlaneseq
    %v667 = vshrl.u32 %v666, 7
    %v668 = vsub.s32 0, %v667
    %v669 = vrot.slane %v638, %v668
    %v670 = vmul.f32 %v664, %v669
    %v671 = vmul.f32 %v665, %v669
    %v672 = vlaneseq
    %v673 = vshrl.u32 %v672, 7
    %v674 = vsub.s32 0, %v673
    %v675 = vrot.slane %v639, %v674
    %v676 = vadd.f32 %v670, %v675
    %v677 = vadd.f32 %v671, %v675
    %v678 = vld [vmem:[#allocation4 + $0x90] sm:$0xff]
    %v679 = vld [vmem:[#allocation4 + $0x98] sm:$0xff]
    %v680 = vld [vmem:[#allocation4 + $0xa0] sm:$0xff]
    %v681 = vld [vmem:[#allocation4 + $0xa8] sm:$0xff]
    %v682 = vld [vmem:[#allocation4 + $0xb0] sm:$0xff]
    %v683 = vld [vmem:[#allocation4 + $0xb8] sm:$0xff]
    %v684 = vld [vmem:[#allocation4 + $0xc0] sm:$0xff]
    %v685 = vld [vmem:[#allocation4 + $0xc8] sm:$0xff]
    %v686 = vld [vmem:[#allocation6 + $0x9] sm:$0x1]
    %v687 = vlaneseq
    %v688 = vshrl.u32 %v687, 7
    %v689 = vsub.s32 0, %v688
    %v690 = vrot.slane %v686, %v689
    %v692 = vsel %vm175, %v676, 0
    %v695 = vsel %vm175, %v677, 0
    %697 = vmatprep.subr.mxu0 0.0
    %698 = vmatpush1.msra.mxu0 %v678
    %699 = vmatprep.subr.mxu0 0.0
    %700 = vmatpush1.msra.mxu0 %v679
    %701 = vmatprep.subr.mxu0 0.0
    %702 = vmatpush1.msra.mxu0 %v680
    %703 = vmatprep.subr.mxu0 0.0
    %704 = vmatpush1.msra.mxu0 %v681
    %705 = vmatprep.subr.mxu0 0.0
    %706 = vmatpush1.msra.mxu0 %v682
    %707 = vmatprep.subr.mxu0 0.0
    %708 = vmatpush1.msra.mxu0 %v683
    %709 = vmatprep.subr.mxu0 0.0
    %710 = vmatpush1.msra.mxu0 %v684
    %711 = vmatprep.subr.mxu0 0.0
    %712 = vmatpush1.msra.mxu0 %v685
    %713 = vmatprep.subr.mxu0 0.0
    %714 = vmatpush1.msra.mxu0 0.0
    %715 = vmatprep.subr.mxu0 0.0
    %716 = vmatpush1.msra.mxu0 0.0
    %717 = vmatprep.subr.mxu0 0.0
    %718 = vmatpush1.msra.mxu0 0.0
    %719 = vmatprep.subr.mxu0 0.0
    %720 = vmatpush1.msra.mxu0 0.0
    %721 = vmatprep.subr.mxu0 0.0
    %722 = vmatpush1.msra.mxu0 0.0
    %723 = vmatprep.subr.mxu0 0.0
    %724 = vmatpush1.msra.mxu0 0.0
    %725 = vmatprep.subr.mxu0 0.0
    %726 = vmatpush1.msra.mxu0 0.0
    %727 = vmatprep.subr.mxu0 0.0
    %728 = vmatpush1.msra.mxu0 0.0
    %729 = vmatprep.subr.mxu0 0.0
    %730 = vmatpush1.msra.mxu0 0.0
    %731 = vmatprep.subr.mxu0 0.0
    %732 = vmatpush1.msra.mxu0 0.0
    %733 = vmatprep.subr.mxu0 0.0
    %734 = vmatpush1.msra.mxu0 0.0
    %735 = vmatprep.subr.mxu0 0.0
    %736 = vmatpush1.msra.mxu0 0.0
    %737 = vmatprep.subr.mxu0 0.0
    %738 = vmatpush1.msra.mxu0 0.0
    %739 = vmatprep.subr.mxu0 0.0
    %740 = vmatpush1.msra.mxu0 0.0
    %741 = vmatprep.subr.mxu0 0.0
    %742 = vmatpush1.msra.mxu0 0.0
    %743 = vmatprep.subr.mxu0 0.0
    %744 = vmatpush1.msra.mxu0 0.0
    %745 = vmatprep.subr.mxu0 0.0
    %746 = vmatpush1.msra.mxu0 0.0
    %747 = vmatprep.subr.mxu0 0.0
    %748 = vmatpush1.msra.mxu0 0.0
    %749 = vmatprep.subr.mxu0 0.0
    %750 = vmatpush1.msra.mxu0 0.0
    %751 = vmatprep.subr.mxu0 0.0
    %752 = vmatpush1.msra.mxu0 0.0
    %753 = vmatprep.subr.mxu0 0.0
    %754 = vmatpush1.msra.mxu0 0.0
    %755 = vmatprep.subr.mxu0 0.0
    %756 = vmatpush1.msra.mxu0 0.0
    %757 = vmatprep.subr.mxu0 0.0
    %758 = vmatpush1.msra.mxu0 0.0
    %759 = vmatprep.subr.mxu0 0.0
    %760 = vmatpush1.msra.mxu0 0.0
    %761 = vmatprep.mubr.f32.mxu0 0.0
    %762 = vmatmul.mubr.f32.gmra.mrb[0].mxu0 %v692
    %v763 = vpop.f32.mrb[0].mxu0
    %v764 = vadd.f32 %v690, %v763
    %v765 = vpop.f32.mrb[0].mxu0
    %766 = vmatprep.mubr.f32.mxu0 0.0
    %767 = vmatmul.mubr.f32.gmra.mrb[0].mxu0 %v695
    %v768 = vpop.f32.mrb[0].mxu0
    %v769 = vadd.f32 %v690, %v768
    %v770 = vpop.f32.mrb[0].mxu0
    %771 = vdwg.mxu0
    %v772 = vmax.f32 %v764, 0.0
    %v773 = vmax.f32 %v769, 0.0
    %v774 = vld [vmem:[#allocation6 + $0xa] sm:$0x1]
    %v775 = vlaneseq
    %v776 = vshrl.u32 %v775, 7
    %v777 = vsub.s32 0, %v776
    %v778 = vrot.slane %v774, %v777
    %795 = vrot.lane.b32.xlu0 %v154, 64
    %v796 = vpop.permute.xlu0 %795
    %797 = vrot.lane.b32.xlu0 %v155, 64
    %v798 = vpop.permute.xlu0 %797
    %799 = vrot.lane.b32.xlu0 %v156, 64
    %v800 = vpop.permute.xlu0 %799
    %801 = vrot.lane.b32.xlu0 %v157, 64
    %v802 = vpop.permute.xlu0 %801
    %803 = vrot.lane.b32.xlu0 %v158, 64
    %v804 = vpop.permute.xlu0 %803
    %805 = vrot.lane.b32.xlu0 %v159, 64
    %v806 = vpop.permute.xlu0 %805
    %807 = vrot.lane.b32.xlu0 %v160, 64
    %v808 = vpop.permute.xlu0 %807
    %809 = vrot.lane.b32.xlu0 %v161, 64
    %v810 = vpop.permute.xlu0 %809
    %811 = vrot.lane.b32.xlu0 %v162, 64
    %v812 = vpop.permute.xlu0 %811
    %813 = vrot.lane.b32.xlu0 %v163, 64
    %v814 = vpop.permute.xlu0 %813
    %815 = vrot.lane.b32.xlu0 %v164, 64
    %v816 = vpop.permute.xlu0 %815
    %817 = vrot.lane.b32.xlu0 %v165, 64
    %v818 = vpop.permute.xlu0 %817
    %819 = vrot.lane.b32.xlu0 %v166, 64
    %v820 = vpop.permute.xlu0 %819
    %821 = vrot.lane.b32.xlu0 %v167, 64
    %v822 = vpop.permute.xlu0 %821
    %823 = vrot.lane.b32.xlu0 %v168, 64
    %v824 = vpop.permute.xlu0 %823
    %825 = vrot.lane.b32.xlu0 %v169, 64
    %v826 = vpop.permute.xlu0 %825
    %843 = vmatprep.subr.mxu0 0.0
    %844 = vmatpush1.msra.mxu0 %v796
    %845 = vmatprep.subr.mxu0 0.0
    %846 = vmatpush1.msra.mxu0 %v798
    %847 = vmatprep.subr.mxu0 0.0
    %848 = vmatpush1.msra.mxu0 %v800
    %849 = vmatprep.subr.mxu0 0.0
    %850 = vmatpush1.msra.mxu0 %v802
    %851 = vmatprep.subr.mxu0 0.0
    %852 = vmatpush1.msra.mxu0 %v804
    %853 = vmatprep.subr.mxu0 0.0
    %854 = vmatpush1.msra.mxu0 %v806
    %855 = vmatprep.subr.mxu0 0.0
    %856 = vmatpush1.msra.mxu0 %v808
    %857 = vmatprep.subr.mxu0 0.0
    %858 = vmatpush1.msra.mxu0 %v810
    %859 = vmatprep.subr.mxu0 0.0
    %860 = vmatpush1.msra.mxu0 %v812
    %861 = vmatprep.subr.mxu0 0.0
    %862 = vmatpush1.msra.mxu0 %v814
    %863 = vmatprep.subr.mxu0 0.0
    %864 = vmatpush1.msra.mxu0 %v816
    %865 = vmatprep.subr.mxu0 0.0
    %866 = vmatpush1.msra.mxu0 %v818
    %867 = vmatprep.subr.mxu0 0.0
    %868 = vmatpush1.msra.mxu0 %v820
    %869 = vmatprep.subr.mxu0 0.0
    %870 = vmatpush1.msra.mxu0 %v822
    %871 = vmatprep.subr.mxu0 0.0
    %872 = vmatpush1.msra.mxu0 %v824
    %873 = vmatprep.subr.mxu0 0.0
    %874 = vmatpush1.msra.mxu0 %v826
    %875 = vmatprep.subr.mxu0 0.0
    %876 = vmatpush1.msra.mxu0 0.0
    %877 = vmatprep.subr.mxu0 0.0
    %878 = vmatpush1.msra.mxu0 0.0
    %879 = vmatprep.subr.mxu0 0.0
    %880 = vmatpush1.msra.mxu0 0.0
    %881 = vmatprep.subr.mxu0 0.0
    %882 = vmatpush1.msra.mxu0 0.0
    %883 = vmatprep.subr.mxu0 0.0
    %884 = vmatpush1.msra.mxu0 0.0
    %885 = vmatprep.subr.mxu0 0.0
    %886 = vmatpush1.msra.mxu0 0.0
    %887 = vmatprep.subr.mxu0 0.0
    %888 = vmatpush1.msra.mxu0 0.0
    %889 = vmatprep.subr.mxu0 0.0
    %890 = vmatpush1.msra.mxu0 0.0
    %891 = vmatprep.subr.mxu0 0.0
    %892 = vmatpush1.msra.mxu0 0.0
    %893 = vmatprep.subr.mxu0 0.0
    %894 = vmatpush1.msra.mxu0 0.0
    %895 = vmatprep.subr.mxu0 0.0
    %896 = vmatpush1.msra.mxu0 0.0
    %897 = vmatprep.subr.mxu0 0.0
    %898 = vmatpush1.msra.mxu0 0.0
    %899 = vmatprep.subr.mxu0 0.0
    %900 = vmatpush1.msra.mxu0 0.0
    %901 = vmatprep.subr.mxu0 0.0
    %902 = vmatpush1.msra.mxu0 0.0
    %903 = vmatprep.subr.mxu0 0.0
    %904 = vmatpush1.msra.mxu0 0.0
    %905 = vmatprep.subr.mxu0 0.0
    %906 = vmatpush1.msra.mxu0 0.0
    %907 = vmatprep.mubr.f32.mxu0 0.0
    %908 = vmatmul.mubr.f32.gmra.mrb[0].mxu0 %v772
    %v909 = vpop.f32.mrb[0].mxu0
    %v910 = vadd.f32 %v778, %v909
    %v911 = vpop.f32.mrb[0].mxu0
    %912 = vmatprep.mubr.f32.mxu0 0.0
    %913 = vmatmul.mubr.f32.gmra.mrb[0].mxu0 %v773
    %v914 = vpop.f32.mrb[0].mxu0
    %v915 = vadd.f32 %v778, %v914
    %v916 = vpop.f32.mrb[0].mxu0
    %917 = vdwg.mxu0
    %v918 = vadd.f32 %v676, %v910
    %v919 = vadd.f32 %v677, %v915
    %v920 = vld [vmem:[#allocation6 + $0xd] sm:$0x1]
    %v921 = vld [vmem:[#allocation6 + $0xe] sm:$0x1]
    %v922 = vsel %vm175, %v918, 0.0
    %923 = vadd.xlane.f32.xlu0 %v922
    %v924 = vpop.xlane.xlu0 %923
    %v925 = vsel %vm175, %v919, 0.0
    %926 = vadd.xlane.f32.xlu0 %v925
    %v927 = vpop.xlane.xlu0 %926
    %v928 = vmul.f32 %v924, %v267
    %v929 = vmul.f32 %v927, %v267
    %v930 = vsub.f32 %v918, %v928
    %v931 = vsub.f32 %v919, %v929
    %v932 = vmul.f32 %v930, %v930
    %v933 = vmul.f32 %v931, %v931
    %v934 = vsel %vm175, %v932, 0.0
    %935 = vadd.xlane.f32.xlu0 %v934
    %v936 = vpop.xlane.xlu0 %935
    %v937 = vsel %vm175, %v933, 0.0
    %938 = vadd.xlane.f32.xlu0 %v937
    %v939 = vpop.xlane.xlu0 %938
    %v940 = vmul.f32 %v936, %v267
    %v941 = vmul.f32 %v939, %v267
    %v942 = vadd.f32 %v940, 1e-05
    %v943 = vadd.f32 %v941, 1e-05
    %v944 = vrsqrt.pop %v942
    %v945 = vrsqrt.pop %v943
    %v946 = vmul.f32 %v930, %v944
    %v947 = vmul.f32 %v931, %v945
    %v948 = vlaneseq
    %v949 = vshrl.u32 %v948, 7
    %v950 = vsub.s32 0, %v949
    %v951 = vrot.slane %v920, %v950
    %v952 = vmul.f32 %v946, %v951
    %v953 = vmul.f32 %v947, %v951
    %v954 = vlaneseq
    %v955 = vshrl.u32 %v954, 7
    %v956 = vsub.s32 0, %v955
    %v957 = vrot.slane %v921, %v956
    %v958 = vadd.f32 %v952, %v957
    %v959 = vadd.f32 %v953, %v957
    %v960 = vld [vmem:[#allocation4 + $0x150] sm:$0xff]
    %v961 = vld [vmem:[#allocation4 + $0x158] sm:$0xff]
    %v962 = vld [vmem:[#allocation4 + $0x160] sm:$0xff]
    %v963 = vld [vmem:[#allocation4 + $0x168] sm:$0xff]
    %v964 = vld [vmem:[#allocation4 + $0x170] sm:$0xff]
    %v965 = vld [vmem:[#allocation4 + $0x178] sm:$0xff]
    %v966 = vld [vmem:[#allocation4 + $0x180] sm:$0xff]
    %v967 = vld [vmem:[#allocation4 + $0x188] sm:$0xff]
    %v968 = vld [vmem:[#allocation6 + $0xf] sm:$0x1]
    %v969 = vlaneseq
    %v970 = vshrl.u32 %v969, 7
    %v971 = vsub.s32 0, %v970
    %v972 = vrot.slane %v968, %v971
    %v974 = vsel %vm175, %v958, 0
    %v977 = vsel %vm175, %v959, 0
    %979 = vmatprep.subr.mxu0 0.0
    %980 = vmatpush1.msra.mxu0 %v960
    %981 = vmatprep.subr.mxu0 0.0
    %982 = vmatpush1.msra.mxu0 %v961
    %983 = vmatprep.subr.mxu0 0.0
    %984 = vmatpush1.msra.mxu0 %v962
    %985 = vmatprep.subr.mxu0 0.0
    %986 = vmatpush1.msra.mxu0 %v963
    %987 = vmatprep.subr.mxu0 0.0
    %988 = vmatpush1.msra.mxu0 %v964
    %989 = vmatprep.subr.mxu0 0.0
    %990 = vmatpush1.msra.mxu0 %v965
    %991 = vmatprep.subr.mxu0 0.0
    %992 = vmatpush1.msra.mxu0 %v966
    %993 = vmatprep.subr.mxu0 0.0
    %994 = vmatpush1.msra.mxu0 %v967
    %995 = vmatprep.subr.mxu0 0.0
    %996 = vmatpush1.msra.mxu0 0.0
    %997 = vmatprep.subr.mxu0 0.0
    %998 = vmatpush1.msra.mxu0 0.0
    %999 = vmatprep.subr.mxu0 0.0
    %1000 = vmatpush1.msra.mxu0 0.0
    %1001 = vmatprep.subr.mxu0 0.0
    %1002 = vmatpush1.msra.mxu0 0.0
    %1003 = vmatprep.subr.mxu0 0.0
    %1004 = vmatpush1.msra.mxu0 0.0
    %1005 = vmatprep.subr.mxu0 0.0
    %1006 = vmatpush1.msra.mxu0 0.0
    %1007 = vmatprep.subr.mxu0 0.0
    %1008 = vmatpush1.msra.mxu0 0.0
    %1009 = vmatprep.subr.mxu0 0.0
    %1010 = vmatpush1.msra.mxu0 0.0
    %1011 = vmatprep.subr.mxu0 0.0
    %1012 = vmatpush1.msra.mxu0 0.0
    %1013 = vmatprep.subr.mxu0 0.0
    %1014 = vmatpush1.msra.mxu0 0.0
    %1015 = vmatprep.subr.mxu0 0.0
    %1016 = vmatpush1.msra.mxu0 0.0
    %1017 = vmatprep.subr.mxu0 0.0
    %1018 = vmatpush1.msra.mxu0 0.0
    %1019 = vmatprep.subr.mxu0 0.0
    %1020 = vmatpush1.msra.mxu0 0.0
    %1021 = vmatprep.subr.mxu0 0.0
    %1022 = vmatpush1.msra.mxu0 0.0
    %1023 = vmatprep.subr.mxu0 0.0
    %1024 = vmatpush1.msra.mxu0 0.0
    %1025 = vmatprep.subr.mxu0 0.0
    %1026 = vmatpush1.msra.mxu0 0.0
    %1027 = vmatprep.subr.mxu0 0.0
    %1028 = vmatpush1.msra.mxu0 0.0
    %1029 = vmatprep.subr.mxu0 0.0
    %1030 = vmatpush1.msra.mxu0 0.0
    %1031 = vmatprep.subr.mxu0 0.0
    %1032 = vmatpush1.msra.mxu0 0.0
    %1033 = vmatprep.subr.mxu0 0.0
    %1034 = vmatpush1.msra.mxu0 0.0
    %1035 = vmatprep.subr.mxu0 0.0
    %1036 = vmatpush1.msra.mxu0 0.0
    %1037 = vmatprep.subr.mxu0 0.0
    %1038 = vmatpush1.msra.mxu0 0.0
    %1039 = vmatprep.subr.mxu0 0.0
    %1040 = vmatpush1.msra.mxu0 0.0
    %1041 = vmatprep.subr.mxu0 0.0
    %1042 = vmatpush1.msra.mxu0 0.0
    %1043 = vmatprep.mubr.f32.mxu0 0.0
    %1044 = vmatmul.mubr.f32.gmra.mrb[0].mxu0 %v974
    %v1045 = vpop.f32.mrb[0].mxu0
    %v1046 = vadd.f32 %v972, %v1045
    %v1047 = vpop.f32.mrb[0].mxu0
    %1048 = vmatprep.mubr.f32.mxu0 0.0
    %1049 = vmatmul.mubr.f32.gmra.mrb[0].mxu0 %v977
    %v1050 = vpop.f32.mrb[0].mxu0
    %v1051 = vadd.f32 %v972, %v1050
    %v1052 = vpop.f32.mrb[0].mxu0
    %1053 = vdwg.mxu0
    %1054 = vst [vmem:[%s3] sm:$0xff] %v1046
    %1055 = vst [vmem:[%s3 + $0x8] sm:$0xff] %v1051
    // Predicated region
    $region26: #{simple_transformer_forward.1} parent=1 // pred_check
      _
    $region27: #{simple_transformer_forward.1} parent=1 // pred_check_branch
      %1057 = sbr.rel (0) target = $region29
    $region28: #{simple_transformer_forward.1} parent=1 // pred_region
      _
    $region29: #{simple_transformer_forward.1} parent=1 // pred_fallthru
      _
    // Predicated region
    $region30: #{simple_transformer_forward.1} parent=1 // pred_check
      _
    $region31: #{simple_transformer_forward.1} parent=1 // pred_check_branch
      %1059 = sbr.rel (0) target = $region33
    $region32: #{simple_transformer_forward.1} parent=1 // pred_region
      _
    $region33: #{simple_transformer_forward.1} parent=1 // pred_fallthru
      _
    %1060 = vsyncpa [#allocation3], 1
    %1061 = vsyncpa [#allocation5], 1

</llo_original>
